<compile_context>
chip_gen: v7x
topology: tpu7x:2x2x1
jax: 0.10.0
libtpu: 0.0.40
codegen_flags: <defaults>
</compile_context>

<pallas_src>
import jax
import jax.numpy as jnp
from jax.experimental import pallas as pl
from jax.experimental.pallas import tpu as pltpu


_LANE = 128                     # lane quantum; multiple of all sublane quanta
_MAX_TILE = 512                 # <= 1 MiB f32 per tile: safe on v5e/v6e/v7x
_FULL_MATRIX_BYTES = 2 << 20    # per-step target / cap for the batched path


def _transpose_kernel(x_ref, o_ref):
    # x_ref: (TB, TM, TN) -> o_ref: (TB, TN, TM); pure XLU data movement.
    o_ref[...] = jnp.swapaxes(x_ref[...], 1, 2)


def _round_up(x, m):
    return ((x + m - 1) // m) * m


def _cost(x):
    nbytes = x.size * x.dtype.itemsize  # read once + write once, zero FLOPs
    return pl.CostEstimate(flops=0, transcendentals=0, bytes_accessed=2 * nbytes)


def _transpose_last_batched(x):
    """Small matrices: full (M, N) extent per block, several batch elems/step."""
    B, M, N = x.shape
    per_mat = M * N * x.dtype.itemsize
    TB = max(1, min(B, _FULL_MATRIX_BYTES // max(per_mat, 1)))
    grid = (pl.cdiv(B, TB),)
    return pl.pallas_call(
        _transpose_kernel,
        out_shape=jax.ShapeDtypeStruct((B, N, M), x.dtype),
        grid_spec=pl.GridSpec(
            grid=grid,
            in_specs=[pl.BlockSpec((TB, M, N), lambda b: (b, 0, 0))],
            out_specs=pl.BlockSpec((TB, N, M), lambda b: (b, 0, 0)),
        ),
        compiler_params=pltpu.CompilerParams(dimension_semantics=("parallel",)),
        cost_estimate=_cost(x),
    )(x)


def _transpose_last_tiled(x):
    """Large matrices: 128-aligned (TM, TN) tiles over a cdiv-padded grid."""
    B, M, N = x.shape
    TM = min(_MAX_TILE, _round_up(M, _LANE))  # output lane dim -> 128-aligned
    TN = min(_MAX_TILE, _round_up(N, _LANE))  # input  lane dim -> 128-aligned
    mt = pl.cdiv(M, TM)
    nt = pl.cdiv(N, TN)

    # Logical axes: 0 = batch (b), 1 = M-tile (i), 2 = N-tile (j).
    # Largest extent first (balanced megacore split on v7x); prefer M-tile axis
    # innermost on ties (consecutive steps write adjacent output along M).
    extents = (B, mt, nt)
    order = sorted(range(3), key=lambda a: (-extents[a], a == 1))
    pos = {a: order.index(a) for a in range(3)}
    grid = tuple(extents[a] for a in order)

    def in_map(*g):
        return (g[pos[0]], g[pos[1]], g[pos[2]])

    def out_map(*g):
        return (g[pos[0]], g[pos[2]], g[pos[1]])

    return pl.pallas_call(
        _transpose_kernel,
        out_shape=jax.ShapeDtypeStruct((B, N, M), x.dtype),
        grid_spec=pl.GridSpec(
            grid=grid,
            in_specs=[pl.BlockSpec((1, TM, TN), in_map)],
            out_specs=pl.BlockSpec((1, TN, TM), out_map),
        ),
        compiler_params=pltpu.CompilerParams(
            dimension_semantics=("parallel", "parallel", "parallel")),
        cost_estimate=_cost(x),
    )(x)


def _transpose_last_2d(x):
    """x: (B, M, N) -> (B, N, M)."""
    _, M, N = x.shape
    if M * N * x.dtype.itemsize <= _FULL_MATRIX_BYTES:
        return _transpose_last_batched(x)
    return _transpose_last_tiled(x)


def transpose_last(x, deconstruct_idx=None, transpose_dim=-2):
    """Pallas equivalent of TransposeLast.forward.

    deconstruct_idx: optional index applied to x before the transpose
                     (pure indexing glue, done host-side).
    transpose_dim:   dim swapped with -1 (module default: -2).
    """
    if deconstruct_idx is not None:
        x = x[deconstruct_idx]

    nd = x.ndim
    d = transpose_dim % nd
    if d == nd - 1:
        return x  # swapping the last dim with itself is a no-op
    if d != nd - 2:
        # TODO(synk): a general (dim, -1) swap with dims in between needs a
        # different block/grid decomposition; only the module default (-2) is
        # lowered to the Pallas kernel.
        raise NotImplementedError(
            "Only transpose_dim == -2 (module default) is supported.")

    lead = x.shape[:-2]
    M, N = x.shape[-2], x.shape[-1]
    B = 1
    for s in lead:
        B *= s

    out = _transpose_last_2d(x.reshape(B, M, N))
    return out.reshape(*lead, N, M)


if __name__ == "__main__":
    key = jax.random.PRNGKey(0)
    k0, k1, k2 = jax.random.split(key, 3)

    # Small shape consistent with the module (batch=2, seq=8, hidden=32):
    # exercises the batched full-extent path.
    x = jax.random.normal(k0, (2, 8, 32), dtype=jnp.float32)
    out = jax.block_until_ready(transpose_last(x))
    assert out.shape == (2, 32, 8)
    assert jnp.array_equal(out, jnp.swapaxes(x, -2, -1))

    # Tiled path: 512x512 tiles over a cdiv grid (last blocks padded).
    x_big = jax.random.normal(k1, (2, 768, 768), dtype=jnp.float32)
    out_big = jax.block_until_ready(transpose_last(x_big))
    assert jnp.array_equal(out_big, jnp.swapaxes(x_big, -2, -1))

    # Non-128-multiple dims: padded edge blocks in both M and N.
    x_odd = jax.random.normal(k2, (1, 900, 700), dtype=jnp.float32)
    out_odd = jax.block_until_ready(transpose_last(x_odd))
    assert jnp.array_equal(out_odd, jnp.swapaxes(x_odd, -2, -1))

    print("KERNEL_OK")
</pallas_src>

<mosaic_0001>
module attributes {stable_mosaic.version = 11 : i64} {
  func.func @_transpose_kernel(%arg0: i32, %arg1: memref<2x8x32xf32, #tpu.memory_space<vmem>>, %arg2: memref<2x32x8xf32, #tpu.memory_space<vmem>>) attributes {dimension_semantics = [#tpu.dimension_semantics<parallel>], iteration_bounds = array<i64: 1>, scalar_prefetch = 0 : i64, scratch_operands = 0 : i64, tpu.core_type = #tpu.core_type<tc>, window_params = [{transform_indices = @transform_0, window_bounds = array<i64: 2, 8, 32>}, {transform_indices = @transform_1, window_bounds = array<i64: 2, 32, 8>}]} {
    %c0 = arith.constant 0 : index
    %c0_0 = arith.constant 0 : index
    %c0_1 = arith.constant 0 : index
    %0 = vector.load %arg1[%c0, %c0_0, %c0_1] : memref<2x8x32xf32, #tpu.memory_space<vmem>>, vector<2x8x32xf32>
    %1 = tpu.transpose %0, [0, 2, 1] : vector<2x8x32xf32> -> vector<2x32x8xf32>
    %c0_2 = arith.constant 0 : index
    %c0_3 = arith.constant 0 : index
    %c0_4 = arith.constant 0 : index
    %2 = vector.load %arg2[%c0_2, %c0_3, %c0_4] : memref<2x32x8xf32, #tpu.memory_space<vmem>>, vector<2x32x8xf32>
    tpu.vector_store %arg2[%c0_2, %c0_3, %c0_4], %1 {strides = array<i32>} : memref<2x32x8xf32, #tpu.memory_space<vmem>>, vector<2x32x8xf32>,
    return
  }
  func.func @transform_0(%arg0: i32) -> (i32, i32, i32) {
    %c0_i32 = arith.constant 0 : i32
    %c0_i32_0 = arith.constant 0 : i32
    %c0_i32_1 = arith.constant 0 : i32
    return %arg0, %c0_i32, %c0_i32_0 : i32, i32, i32
  }
  func.func @transform_1(%arg0: i32) -> (i32, i32, i32) {
    %c0_i32 = arith.constant 0 : i32
    %c0_i32_0 = arith.constant 0 : i32
    %c0_i32_1 = arith.constant 0 : i32
    return %arg0, %c0_i32, %c0_i32_0 : i32, i32, i32
  }
}

</mosaic_0001>

<llo_original>
// kernel: tpu_custom_call.1
$region0: #{tpu_custom_call.1}
  #allocation0 [shape = 'u32[]', space=smem, size = 0x4, offset = 0x4, fixed_abs, tag = 'smem constant byte address 0x4 - core index']
  #allocation1 [shape = 'u32[144,128]{1,0:T(1,128)}', space=vmem, size = 0x12000, scoped, tag = 'internal scratch']
  %s0 = inlined_call_operand.hbm [shape: f32[2,8,32], index: 0, kind: input, shape index: {}]
  %s1 = inlined_call_operand.vmem [shape: f32[2,32,8], index: 1, kind: output, shape index: {}]
  %s2 = sld [smem:[#allocation0]]
  $region18: #{tpu_custom_call.1} parent=0
    _
  %s4 = ssub.s32 1, %s2
  %s5 = scalar_select 0, %s4, %s2
  $region1: #{tpu_custom_call.1} parent=0
    #allocation2 [shape = 'u8[8192]{0}', space=vmem, size = 0x2000, scoped, tag = 'input window, operand 0, single buffered']
    #allocation3 [shape = 's32[1]{0}', space=sflag, size = 0x4, scoped, tag = 'scoped memory for tpu_custom_call.1']
    %6 = vsyncpa [#allocation3], 0
    // Predicated region
    $region2: #{tpu_custom_call.1} parent=1 // pred_check
      _
    $region3: #{tpu_custom_call.1} parent=1 // pred_check_branch
      %8 = sbr.rel (0) target = $region5
    $region4: #{tpu_custom_call.1} parent=1 // pred_region
      %s10 = ssub.s32 256, 256
      %11 = vsyncadd [#allocation3], %s10
      %s12 = sshll.u32 [#allocation2], 4
      %s13 = int_to_ptr.vmem [resolvable:$true] %s12
      %18 = dma.hbm_to_vmem [thread:$0]  %s0, 256, %s13, [#allocation3], 128, 128, 8
    $region5: #{tpu_custom_call.1} parent=1 // pred_fallthru
      _
    // Predicated region
    $region6: #{tpu_custom_call.1} parent=1 // pred_check
      _
    $region7: #{tpu_custom_call.1} parent=1 // pred_check_branch
      %20 = sbr.rel (0) target = $region9
    $region8: #{tpu_custom_call.1} parent=1 // pred_region
      %21 = dma.done [#allocation3], 256
    $region9: #{tpu_custom_call.1} parent=1 // pred_fallthru
      _
    %v22 = vld [vmem:[#allocation2] sm:$0xff]
    %v23 = vld [vmem:[#allocation2 + $0x8] sm:$0xff]
    %24 = vxpose.xlu0.b32.start [1/16] %v22, 128
    %25 = vxpose.xlu0.b32.cont [2/16] 0.0, 128
    %26 = vxpose.xlu0.b32.cont [3/16] 0.0, 128
    %27 = vxpose.xlu0.b32.cont [4/16] 0.0, 128
    %28 = vxpose.xlu0.b32.cont [5/16] 0.0, 128
    %29 = vxpose.xlu0.b32.cont [6/16] 0.0, 128
    %30 = vxpose.xlu0.b32.cont [7/16] 0.0, 128
    %31 = vxpose.xlu0.b32.cont [8/16] 0.0, 128
    %32 = vxpose.xlu0.b32.cont [9/16] 0.0, 128
    %33 = vxpose.xlu0.b32.cont [10/16] 0.0, 128
    %34 = vxpose.xlu0.b32.cont [11/16] 0.0, 128
    %35 = vxpose.xlu0.b32.cont [12/16] 0.0, 128
    %36 = vxpose.xlu0.b32.cont [13/16] 0.0, 128
    %37 = vxpose.xlu0.b32.cont [14/16] 0.0, 128
    %38 = vxpose.xlu0.b32.cont [15/16] 0.0, 128
    %39 = vxpose.xlu0.b32.end [16/16] 0.0, 128
    %v40 = vpop.trf.xlu0
    %v41 = vpop.trf.xlu0
    %v42 = vpop.trf.xlu0
    %v43 = vpop.trf.xlu0
    %v44 = vpop.trf.xlu0
    %v45 = vpop.trf.xlu0
    %v46 = vpop.trf.xlu0
    %v47 = vpop.trf.xlu0
    %v48 = vpop.trf.xlu0
    %v49 = vpop.trf.xlu0
    %v50 = vpop.trf.xlu0
    %v51 = vpop.trf.xlu0
    %v52 = vpop.trf.xlu0
    %v53 = vpop.trf.xlu0
    %v54 = vpop.trf.xlu0
    %v55 = vpop.trf.xlu0
    %56 = vxpose.xlu0.b32.start [1/16] %v23, 128
    %57 = vxpose.xlu0.b32.cont [2/16] 0.0, 128
    %58 = vxpose.xlu0.b32.cont [3/16] 0.0, 128
    %59 = vxpose.xlu0.b32.cont [4/16] 0.0, 128
    %60 = vxpose.xlu0.b32.cont [5/16] 0.0, 128
    %61 = vxpose.xlu0.b32.cont [6/16] 0.0, 128
    %62 = vxpose.xlu0.b32.cont [7/16] 0.0, 128
    %63 = vxpose.xlu0.b32.cont [8/16] 0.0, 128
    %64 = vxpose.xlu0.b32.cont [9/16] 0.0, 128
    %65 = vxpose.xlu0.b32.cont [10/16] 0.0, 128
    %66 = vxpose.xlu0.b32.cont [11/16] 0.0, 128
    %67 = vxpose.xlu0.b32.cont [12/16] 0.0, 128
    %68 = vxpose.xlu0.b32.cont [13/16] 0.0, 128
    %69 = vxpose.xlu0.b32.cont [14/16] 0.0, 128
    %70 = vxpose.xlu0.b32.cont [15/16] 0.0, 128
    %71 = vxpose.xlu0.b32.end [16/16] 0.0, 128
    %v72 = vpop.trf.xlu0
    %v73 = vpop.trf.xlu0
    %v74 = vpop.trf.xlu0
    %v75 = vpop.trf.xlu0
    %v76 = vpop.trf.xlu0
    %v77 = vpop.trf.xlu0
    %v78 = vpop.trf.xlu0
    %v79 = vpop.trf.xlu0
    %v80 = vpop.trf.xlu0
    %v81 = vpop.trf.xlu0
    %v82 = vpop.trf.xlu0
    %v83 = vpop.trf.xlu0
    %v84 = vpop.trf.xlu0
    %v85 = vpop.trf.xlu0
    %v86 = vpop.trf.xlu0
    %v87 = vpop.trf.xlu0
    %vm88 = vcmask 64512
    %89 = vst.msk [vmem:[%s1] sm:$0xff] %vm88, %v40
    %90 = vst.msk [vmem:[%s1 + $0x8] sm:$0xff] %vm88, %v41
    %91 = vst.msk [vmem:[%s1 + $0x10] sm:$0xff] %vm88, %v42
    %92 = vst.msk [vmem:[%s1 + $0x18] sm:$0xff] %vm88, %v43
    %93 = vst.msk [vmem:[%s1 + $0x20] sm:$0xff] %vm88, %v72
    %94 = vst.msk [vmem:[%s1 + $0x28] sm:$0xff] %vm88, %v73
    %95 = vst.msk [vmem:[%s1 + $0x30] sm:$0xff] %vm88, %v74
    %96 = vst.msk [vmem:[%s1 + $0x38] sm:$0xff] %vm88, %v75
    // Predicated region
    $region10: #{tpu_custom_call.1} parent=1 // pred_check
      _
    $region11: #{tpu_custom_call.1} parent=1 // pred_check_branch
      %98 = sbr.rel (0) target = $region13
    $region12: #{tpu_custom_call.1} parent=1 // pred_region
      _
    $region13: #{tpu_custom_call.1} parent=1 // pred_fallthru
      _
    // Predicated region
    $region14: #{tpu_custom_call.1} parent=1 // pred_check
      _
    $region15: #{tpu_custom_call.1} parent=1 // pred_check_branch
      %100 = sbr.rel (0) target = $region17
    $region16: #{tpu_custom_call.1} parent=1 // pred_region
      _
    $region17: #{tpu_custom_call.1} parent=1 // pred_fallthru
      _
    %101 = vsyncpa [#allocation3], 1

</llo_original>
